<compile_context>
chip_gen: v7x
topology: tpu7x:2x2x1
jax: 0.10.0
libtpu: 0.0.40
codegen_flags: <defaults>
</compile_context>

<pallas_src>
import functools

import numpy as np
import jax
import jax.numpy as jnp
from jax.experimental import pallas as pl
from jax.experimental.pallas import tpu as pltpu

# StateSE2Index: x=0, y=1, heading=2 -> size() == 3
SE2_SIZE = 3
HEADING_IDX = 2
LANES = 128
SUBLANES = 8
DEFAULT_B_TILE = 256  # M=256 fills the v6e/v7x MXU; multiple of 128 for v5e too


def _round_up(n: int, m: int) -> int:
    return (n + m - 1) // m * m


def _trajectory_head_kernel(x_ref, w1_ref, b_ref, w2_ref, o_ref,
                            *, d_ffn_p: int, num_poses: int):
    # x:  (bt, d_model)                bf16
    # w1: (d_model, d_ffn_p)           bf16  (cols zero-padded to 128 multiple)
    # b:  (1, d_ffn_p + out_p)         f32   (= [b1 | b2], both zero-padded)
    # w2: (d_ffn_p, out_p)             bf16  (component-major cols, zero-padded)
    # o:  (bt, out_p)                  f32   (lane-dense output slab)
    b1 = b_ref[:, :d_ffn_p]           # static, lane-aligned slices (128 multiples)
    b2 = b_ref[:, d_ffn_p:]

    h = jnp.dot(x_ref[...], w1_ref[...], preferred_element_type=jnp.float32) + b1
    h = jnp.maximum(h, 0.0)           # ReLU (f32)

    y = jnp.dot(h.astype(jnp.bfloat16), w2_ref[...],
                preferred_element_type=jnp.float32) + b2

    # Component-major output columns: [x poses | y poses | heading poses | pad].
    # Single compare: pad columns are exactly zero (zero weights/bias), so
    # tanh(0)*pi == 0 keeps them zero; they are dropped by the wrapper anyway.
    col = jax.lax.broadcasted_iota(jnp.int32, y.shape, dimension=1)
    y = jnp.where(col >= HEADING_IDX * num_poses,
                  jnp.tanh(y) * jnp.float32(np.pi), y)

    o_ref[...] = y.astype(o_ref.dtype)


def trajectory_head_forward(object_queries, packed_params, num_poses,
                            *, b_tile: int = DEFAULT_B_TILE):
    """object_queries: (B, d_model) f32 -> {'trajectory': (B, num_poses, 3)} f32."""
    w1, b, w2 = packed_params
    B, d_model = object_queries.shape
    d_ffn_p = w1.shape[1]
    out_p = w2.shape[1]
    out_dim = num_poses * SE2_SIZE

    # Batch tiling: sublane-aligned tile, capped at b_tile; pad B with zero rows.
    bt = min(b_tile, _round_up(B, SUBLANES))
    Bp = _round_up(B, bt)
    x = object_queries.astype(jnp.bfloat16)     # halve the streamed-input bytes
    if Bp != B:
        x = jnp.pad(x, ((0, Bp - B), (0, 0)))

    kernel = functools.partial(_trajectory_head_kernel,
                               d_ffn_p=d_ffn_p, num_poses=num_poses)

    flat = pl.pallas_call(
        kernel,
        out_shape=jax.ShapeDtypeStruct((Bp, out_p), jnp.float32),
        grid=(Bp // bt,),
        in_specs=[
            pl.BlockSpec((bt, d_model), lambda i: (i, 0)),        # streamed x tiles
            pl.BlockSpec((d_model, d_ffn_p), lambda i: (0, 0)),   # weights: constant
            pl.BlockSpec((1, d_ffn_p + out_p), lambda i: (0, 0)),  # block index ->
            pl.BlockSpec((d_ffn_p, out_p), lambda i: (0, 0)),     # fetched once
        ],
        out_specs=pl.BlockSpec((bt, out_p), lambda i: (i, 0)),
        compiler_params=pltpu.CompilerParams(
            dimension_semantics=("parallel",)),   # v7x: shard batch over 2 TCs
        cost_estimate=pl.CostEstimate(
            flops=2 * Bp * (d_model * d_ffn_p + d_ffn_p * out_p),
            transcendentals=Bp * out_p,            # tanh runs on every padded col
            bytes_accessed=(x.size * 2 + w1.size * 2 + b.size * 4
                            + w2.size * 2 + Bp * out_p * 4),
        ),
    )(x, w1, b, w2)

    # Host/API boundary: drop pad rows + lane padding, undo the component-major
    # permutation: (B, 3*num_poses) -> (B, 3, num_poses) -> (B, num_poses, 3).
    poses = flat[:B, :out_dim].reshape(B, SE2_SIZE, num_poses).transpose(0, 2, 1)
    return {"trajectory": poses}


def init_params(key, d_model, d_ffn, num_poses):
    """nn.Linear-style init (uniform +-1/sqrt(fan_in)) in the original layout."""
    out_dim = num_poses * SE2_SIZE
    k1, k2, k3, k4 = jax.random.split(key, 4)
    lim1 = 1.0 / np.sqrt(d_model)
    lim2 = 1.0 / np.sqrt(d_ffn)
    w1 = jax.random.uniform(k1, (d_model, d_ffn), jnp.float32, -lim1, lim1)
    b1 = jax.random.uniform(k2, (d_ffn,), jnp.float32, -lim1, lim1)
    w2 = jax.random.uniform(k3, (d_ffn, out_dim), jnp.float32, -lim2, lim2)
    b2 = jax.random.uniform(k4, (out_dim,), jnp.float32, -lim2, lim2)
    return w1, b1, w2, b2


def pack_params(raw_params, num_poses):
    """One-time layout plumbing: pad to 128-lane multiples, permute w2/b2 to
    component-major columns, cast weights to bf16, concatenate biases into a
    single f32 buffer."""
    w1, b1, w2, b2 = raw_params
    d_model, d_ffn = w1.shape
    out_dim = num_poses * SE2_SIZE
    d_ffn_p = _round_up(d_ffn, LANES)
    out_p = _round_up(out_dim, LANES)

    # Column permutation: new column c*num_poses + p  <-  old column p*3 + c
    perm = np.array([p * SE2_SIZE + c for c in range(SE2_SIZE)
                     for p in range(num_poses)], dtype=np.int32)

    w1_p = jnp.zeros((d_model, d_ffn_p), jnp.float32).at[:, :d_ffn].set(w1)
    b1_p = jnp.zeros((1, d_ffn_p), jnp.float32).at[0, :d_ffn].set(b1)
    w2_p = jnp.zeros((d_ffn_p, out_p), jnp.float32).at[:d_ffn, :out_dim].set(w2[:, perm])
    b2_p = jnp.zeros((1, out_p), jnp.float32).at[0, :out_dim].set(b2[perm])

    b_cat = jnp.concatenate([b1_p, b2_p], axis=1)   # (1, d_ffn_p + out_p) f32
    return (w1_p.astype(jnp.bfloat16), b_cat, w2_p.astype(jnp.bfloat16))


def _reference_forward(object_queries, packed_params, num_poses):
    """Pure-JAX reference using the same packed (bf16-rounded) params."""
    w1, b, w2 = packed_params
    d_ffn_p = w1.shape[1]
    out_dim = num_poses * SE2_SIZE
    b1 = b[:, :d_ffn_p]
    b2 = b[:, d_ffn_p:]
    xb = object_queries.astype(jnp.bfloat16).astype(jnp.float32)
    h = jnp.maximum(xb @ w1.astype(jnp.float32) + b1, 0.0)
    hb = h.astype(jnp.bfloat16).astype(jnp.float32)
    y = hb @ w2.astype(jnp.float32) + b2
    col = np.arange(y.shape[1])
    y = jnp.where((col >= HEADING_IDX * num_poses)[None, :], jnp.tanh(y) * np.pi, y)
    return y[:, :out_dim].reshape(-1, SE2_SIZE, num_poses).transpose(0, 2, 1)


if __name__ == "__main__":
    # Small shapes consistent with the module.
    B, d_model, d_ffn, num_poses = 8, 32, 64, 8

    key = jax.random.PRNGKey(0)
    k_x, k_p = jax.random.split(key)
    object_queries = jax.random.normal(k_x, (B, d_model), jnp.float32)
    raw_params = init_params(k_p, d_model, d_ffn, num_poses)
    packed = pack_params(raw_params, num_poses)

    out = trajectory_head_forward(object_queries, packed, num_poses)
    traj = jax.block_until_ready(out["trajectory"])
    assert traj.shape == (B, num_poses, SE2_SIZE)

    # Reference check (same bf16-rounded weights/inputs, f32 accumulation).
    ref = _reference_forward(object_queries, packed, num_poses)
    np.testing.assert_allclose(np.asarray(traj), np.asarray(ref),
                               rtol=1e-4, atol=1e-4)

    print("KERNEL_OK")
</pallas_src>

<mosaic_0001>
module attributes {stable_mosaic.version = 11 : i64} {
  func.func @_trajectory_head_kernel(%arg0: i32, %arg1: memref<8x32xbf16, #tpu.memory_space<vmem>>, %arg2: memref<32x128xbf16, #tpu.memory_space<vmem>>, %arg3: memref<1x256xf32, #tpu.memory_space<vmem>>, %arg4: memref<128x128xbf16, #tpu.memory_space<vmem>>, %arg5: memref<8x128xf32, #tpu.memory_space<vmem>>) attributes {dimension_semantics = [#tpu.dimension_semantics<parallel>], iteration_bounds = array<i64: 1>, scalar_prefetch = 0 : i64, scratch_operands = 0 : i64, tpu.core_type = #tpu.core_type<tc>, window_params = [{transform_indices = @transform_0, window_bounds = array<i64: 8, 32>}, {pipeline_mode = #tpu.pipeline_mode<synchronous>, transform_indices = @transform_1, window_bounds = array<i64: 32, 128>}, {pipeline_mode = #tpu.pipeline_mode<synchronous>, transform_indices = @transform_2, window_bounds = array<i64: 1, 256>}, {pipeline_mode = #tpu.pipeline_mode<synchronous>, transform_indices = @transform_3, window_bounds = array<i64: 128, 128>}, {transform_indices = @transform_4, window_bounds = array<i64: 8, 128>}]} {
    %c0 = arith.constant 0 : index
    %c0_0 = arith.constant 0 : index
    %0 = vector.load %arg3[%c0, %c0_0] : memref<1x256xf32, #tpu.memory_space<vmem>>, vector<1x128xf32>
    %c0_1 = arith.constant 0 : index
    %c128 = arith.constant 128 : index
    %1 = vector.load %arg3[%c0_1, %c128] : memref<1x256xf32, #tpu.memory_space<vmem>>, vector<1x128xf32>
    %c0_2 = arith.constant 0 : index
    %c0_3 = arith.constant 0 : index
    %2 = vector.load %arg1[%c0_2, %c0_3] : memref<8x32xbf16, #tpu.memory_space<vmem>>, vector<8x32xbf16>
    %c0_4 = arith.constant 0 : index
    %c0_5 = arith.constant 0 : index
    %3 = vector.load %arg2[%c0_4, %c0_5] : memref<32x128xbf16, #tpu.memory_space<vmem>>, vector<32x128xbf16>
    %cst = arith.constant dense<0.000000e+00> : vector<8x128xf32>
    %4 = tpu.matmul %2, %3, %cst {dimension_numbers = #tpu.dot_dimension_numbers<[1], [0], [0], [1], [0, 0, 1, 1], [], []>} : vector<8x32xbf16>, vector<32x128xbf16>, vector<8x128xf32> -> vector<8x128xf32>
    %5 = vector.broadcast %0 : vector<1x128xf32> to vector<8x128xf32>
    %6 = arith.addf %4, %5 : vector<8x128xf32>
    %cst_6 = arith.constant 0.000000e+00 : f32
    %7 = vector.broadcast %cst_6 : f32 to vector<8x128xf32>
    %8 = arith.maximumf %6, %7 : vector<8x128xf32>
    %9 = arith.truncf %8 : vector<8x128xf32> to vector<8x128xbf16>
    %c0_7 = arith.constant 0 : index
    %c0_8 = arith.constant 0 : index
    %10 = vector.load %arg4[%c0_7, %c0_8] : memref<128x128xbf16, #tpu.memory_space<vmem>>, vector<128x128xbf16>
    %cst_9 = arith.constant dense<0.000000e+00> : vector<8x128xf32>
    %11 = tpu.matmul %9, %10, %cst_9 {dimension_numbers = #tpu.dot_dimension_numbers<[1], [0], [0], [1], [0, 0, 1, 1], [], []>} : vector<8x128xbf16>, vector<128x128xbf16>, vector<8x128xf32> -> vector<8x128xf32>
    %12 = vector.broadcast %1 : vector<1x128xf32> to vector<8x128xf32>
    %13 = arith.addf %11, %12 : vector<8x128xf32>
    %14 = tpu.iota {dimensions = array<i32: 1>} : vector<8x128xi32>
    %c16_i32 = arith.constant 16 : i32
    %15 = vector.broadcast %c16_i32 : i32 to vector<8x128xi32>
    %16 = arith.cmpi sge, %14, %15 : vector<8x128xi32>
    %17 = math.tanh %13 : vector<8x128xf32>
    %cst_10 = arith.constant 3.14159274 : f32
    %18 = vector.broadcast %cst_10 : f32 to vector<8x128xf32>
    %19 = arith.mulf %17, %18 : vector<8x128xf32>
    %20 = arith.select %16, %19, %13 : vector<8x128xi1>, vector<8x128xf32>
    %c0_11 = arith.constant 0 : index
    %c0_12 = arith.constant 0 : index
    %21 = vector.load %arg5[%c0_11, %c0_12] : memref<8x128xf32, #tpu.memory_space<vmem>>, vector<8x128xf32>
    tpu.vector_store %arg5[%c0_11, %c0_12], %20 {strides = array<i32>} : memref<8x128xf32, #tpu.memory_space<vmem>>, vector<8x128xf32>,
    return
  }
  func.func @transform_0(%arg0: i32) -> (i32, i32) {
    %c0_i32 = arith.constant 0 : i32
    %c0_i32_0 = arith.constant 0 : i32
    return %arg0, %c0_i32 : i32, i32
  }
  func.func @transform_1(%arg0: i32) -> (i32, i32) {
    %c0_i32 = arith.constant 0 : i32
    %c0_i32_0 = arith.constant 0 : i32
    %c0_i32_1 = arith.constant 0 : i32
    return %c0_i32, %c0_i32_0 : i32, i32
  }
  func.func @transform_2(%arg0: i32) -> (i32, i32) {
    %c0_i32 = arith.constant 0 : i32
    %c0_i32_0 = arith.constant 0 : i32
    %c0_i32_1 = arith.constant 0 : i32
    return %c0_i32, %c0_i32_0 : i32, i32
  }
  func.func @transform_3(%arg0: i32) -> (i32, i32) {
    %c0_i32 = arith.constant 0 : i32
    %c0_i32_0 = arith.constant 0 : i32
    %c0_i32_1 = arith.constant 0 : i32
    return %c0_i32, %c0_i32_0 : i32, i32
  }
  func.func @transform_4(%arg0: i32) -> (i32, i32) {
    %c0_i32 = arith.constant 0 : i32
    %c0_i32_0 = arith.constant 0 : i32
    return %arg0, %c0_i32 : i32, i32
  }
}

</mosaic_0001>

<llo_original>
// kernel: tpu_custom_call.1
$region0: #{tpu_custom_call.1}
  #allocation0 [shape = 'u32[]', space=smem, size = 0x4, offset = 0x4, fixed_abs, tag = 'smem constant byte address 0x4 - core index']
  #allocation1 [shape = 'u32[144,128]{1,0:T(1,128)}', space=vmem, size = 0x12000, scoped, tag = 'internal scratch']
  %s0 = inlined_call_operand.hbm [shape: bf16[8,32], index: 0, kind: input, shape index: {}]
  %s1 = inlined_call_operand.hbm [shape: bf16[32,128], index: 1, kind: input, shape index: {}]
  %s2 = inlined_call_operand.vmem [shape: f32[1,256], index: 2, kind: input, shape index: {}]
  %s3 = inlined_call_operand.hbm [shape: bf16[128,128], index: 3, kind: input, shape index: {}]
  %s4 = inlined_call_operand.hbm [shape: f32[8,128], index: 4, kind: output, shape index: {}]
  %s5 = sld [smem:[#allocation0]]
  $region38: #{tpu_custom_call.1} parent=0
    _
  %s7 = ssub.s32 1, %s5
  %s8 = scalar_select 0, %s7, %s5
  $region1: #{tpu_custom_call.1} parent=0
    #allocation2 [shape = 'u8[2048]{0}', space=vmem, size = 0x800, scoped, tag = 'input window, operand 0, single buffered']
    #allocation3 [shape = 's32[1]{0}', space=sflag, size = 0x4, scoped, tag = 'scoped memory for tpu_custom_call.1']
    #allocation4 [shape = 's32[1]{0}', space=sflag, size = 0x4, scoped, tag = 'scoped memory for tpu_custom_call.1']
    #allocation5 [shape = 'u8[8192]{0}', space=vmem, size = 0x2000, scoped, tag = 'input window, operand 1, single buffered']
    #allocation6 [shape = 's32[1]{0}', space=sflag, size = 0x4, scoped, tag = 'scoped memory for tpu_custom_call.1']
    #allocation7 [shape = 'u8[32768]{0}', space=vmem, size = 0x8000, scoped, tag = 'input window, operand 3, single buffered']
    #allocation8 [shape = 'u8[4096]{0}', space=vmem, size = 0x1000, scoped, tag = 'output window, operand 0, single buffered']
    %9 = vsyncpa [#allocation3], 0
    %10 = vsyncpa [#allocation6], 0
    %11 = vsyncpa [#allocation4], 0
    // Predicated region
    $region2: #{tpu_custom_call.1} parent=1 // pred_check
      _
    $region3: #{tpu_custom_call.1} parent=1 // pred_check_branch
      %13 = sbr.rel (0) target = $region5
    $region4: #{tpu_custom_call.1} parent=1 // pred_region
      %s15 = ssub.s32 64, 64
      %16 = vsyncadd [#allocation3], %s15
      %s18 = sshll.u32 [#allocation2], 4
      %s19 = int_to_ptr.vmem [resolvable:$true] %s18
      %21 = dma.hbm_to_vmem [thread:$0]  %s0, 64, %s19, [#allocation3]
    $region5: #{tpu_custom_call.1} parent=1 // pred_fallthru
      _
    // Predicated region
    $region6: #{tpu_custom_call.1} parent=1 // pred_check
      _
    $region7: #{tpu_custom_call.1} parent=1 // pred_check_branch
      %23 = sbr.rel (0) target = $region9
    $region8: #{tpu_custom_call.1} parent=1 // pred_region
      %s25 = ssub.s32 256, 256
      %26 = vsyncadd [#allocation6], %s25
      %s27 = sshll.u32 [#allocation5], 4
      %s28 = int_to_ptr.vmem [resolvable:$true] %s27
      %33 = dma.hbm_to_vmem [thread:$0]  %s1, 256, %s28, [#allocation6], 64, 64, 4
    $region9: #{tpu_custom_call.1} parent=1 // pred_fallthru
      _
    // Predicated region
    $region10: #{tpu_custom_call.1} parent=1 // pred_check
      _
    $region11: #{tpu_custom_call.1} parent=1 // pred_check_branch
      %35 = sbr.rel (0) target = $region13
    $region12: #{tpu_custom_call.1} parent=1 // pred_region
      _
    $region13: #{tpu_custom_call.1} parent=1 // pred_fallthru
      _
    // Predicated region
    $region14: #{tpu_custom_call.1} parent=1 // pred_check
      _
    $region15: #{tpu_custom_call.1} parent=1 // pred_check_branch
      %37 = sbr.rel (0) target = $region17
    $region16: #{tpu_custom_call.1} parent=1 // pred_region
      %s39 = ssub.s32 1024, 1024
      %40 = vsyncadd [#allocation6], %s39
      %s41 = sshll.u32 [#allocation7], 4
      %s42 = int_to_ptr.vmem [resolvable:$true] %s41
      %47 = dma.hbm_to_vmem [thread:$0]  %s3, 1024, %s42, [#allocation6], 64, 64, 4
    $region17: #{tpu_custom_call.1} parent=1 // pred_fallthru
      _
    // Predicated region
    $region18: #{tpu_custom_call.1} parent=1 // pred_check
      _
    $region19: #{tpu_custom_call.1} parent=1 // pred_check_branch
      %49 = sbr.rel (0) target = $region21
    $region20: #{tpu_custom_call.1} parent=1 // pred_region
      %50 = dma.done [#allocation3], 64
    $region21: #{tpu_custom_call.1} parent=1 // pred_fallthru
      _
    // Predicated region
    $region22: #{tpu_custom_call.1} parent=1 // pred_check
      _
    $region23: #{tpu_custom_call.1} parent=1 // pred_check_branch
      %52 = sbr.rel (0) target = $region25
    $region24: #{tpu_custom_call.1} parent=1 // pred_region
      %53 = dma.done [#allocation6], 256
    $region25: #{tpu_custom_call.1} parent=1 // pred_fallthru
      _
    // Predicated region
    $region26: #{tpu_custom_call.1} parent=1 // pred_check
      _
    $region27: #{tpu_custom_call.1} parent=1 // pred_check_branch
      %55 = sbr.rel (0) target = $region29
    $region28: #{tpu_custom_call.1} parent=1 // pred_region
      %56 = dma.done [#allocation6], 1024
    $region29: #{tpu_custom_call.1} parent=1 // pred_fallthru
      _
    %v58 = vld [vmem:[%s2] sm:$0x1]
    %v59 = vld [vmem:[%s2 + $0x1] sm:$0x1]
    %v60 = vld [vmem:[#allocation2] sm:$0xf]
    %v61 = vld [vmem:[#allocation5] sm:$0xf]
    %v62 = vld [vmem:[#allocation5 + $0x4] sm:$0xf]
    %v63 = vld [vmem:[#allocation5 + $0x8] sm:$0xf]
    %v64 = vld [vmem:[#allocation5 + $0xc] sm:$0xf]
    %v66 = vlaneseq
    %v67 = vshrl.u32 %v66, 7
    %v68 = vsub.s32 0, %v67
    %v69 = vrot.slane %v58, %v68
    %v75 = vunpack.c.l.b16 %v61
    %v76 = vunpack.c.l.b16 %v62
    %v77 = vunpack.c.l.b16 %v63
    %v78 = vunpack.c.l.b16 %v64
    %v79 = vpack.c.b16 %v76, %v75
    %v80 = vpack.c.b16 %v78, %v77
    %vm83 = vcmask 261120
    %v85 = vsel %vm83, %v60, 0
    %87 = vmatprep.subr.bf16.mxu0 0
    %88 = vmatpush1.bf16.msra.mxu0 %v79
    %89 = vmatprep.subr.bf16.mxu0 0
    %90 = vmatpush1.bf16.msra.mxu0 %v80
    %91 = vmatprep.subr.bf16.mxu0 0
    %92 = vmatpush1.bf16.msra.mxu0 0
    %93 = vmatprep.subr.bf16.mxu0 0
    %94 = vmatpush1.bf16.msra.mxu0 0
    %95 = vmatprep.subr.bf16.mxu0 0
    %96 = vmatpush1.bf16.msra.mxu0 0
    %97 = vmatprep.subr.bf16.mxu0 0
    %98 = vmatpush1.bf16.msra.mxu0 0
    %99 = vmatprep.subr.bf16.mxu0 0
    %100 = vmatpush1.bf16.msra.mxu0 0
    %101 = vmatprep.subr.bf16.mxu0 0
    %102 = vmatpush1.bf16.msra.mxu0 0
    %103 = vmatprep.subr.bf16.mxu0 0
    %104 = vmatpush1.bf16.msra.mxu0 0
    %105 = vmatprep.subr.bf16.mxu0 0
    %106 = vmatpush1.bf16.msra.mxu0 0
    %107 = vmatprep.subr.bf16.mxu0 0
    %108 = vmatpush1.bf16.msra.mxu0 0
    %109 = vmatprep.subr.bf16.mxu0 0
    %110 = vmatpush1.bf16.msra.mxu0 0
    %111 = vmatprep.subr.bf16.mxu0 0
    %112 = vmatpush1.bf16.msra.mxu0 0
    %113 = vmatprep.subr.bf16.mxu0 0
    %114 = vmatpush1.bf16.msra.mxu0 0
    %115 = vmatprep.subr.bf16.mxu0 0
    %116 = vmatpush1.bf16.msra.mxu0 0
    %117 = vmatprep.subr.bf16.mxu0 0
    %118 = vmatpush1.bf16.msra.mxu0 0
    %119 = vmatprep.mubr.bf16.mxu0 0
    %120 = vmatmul.mubr.bf16.gmra.mrb[0].mxu0 %v85
    %v121 = vpop.f32.mrb[0].mxu0
    %v122 = vadd.f32 %v69, %v121
    %v123 = vpop.f32.mrb[0].mxu0
    %v124 = vpop.f32.mrb[0].mxu0
    %v125 = vpop.f32.mrb[0].mxu0
    %126 = vdwg.mxu0
    %v127 = vmax.f32 %v122, 0.0
    %v128 = vpack.c.bf16 %v127, %v127
    %v129 = vld [vmem:[#allocation7] sm:$0xf]
    %v130 = vld [vmem:[#allocation7 + $0x4] sm:$0xf]
    %v131 = vld [vmem:[#allocation7 + $0x8] sm:$0xf]
    %v132 = vld [vmem:[#allocation7 + $0xc] sm:$0xf]
    %v133 = vld [vmem:[#allocation7 + $0x10] sm:$0xf]
    %v134 = vld [vmem:[#allocation7 + $0x14] sm:$0xf]
    %v135 = vld [vmem:[#allocation7 + $0x18] sm:$0xf]
    %v136 = vld [vmem:[#allocation7 + $0x1c] sm:$0xf]
    %v137 = vld [vmem:[#allocation7 + $0x20] sm:$0xf]
    %v138 = vld [vmem:[#allocation7 + $0x24] sm:$0xf]
    %v139 = vld [vmem:[#allocation7 + $0x28] sm:$0xf]
    %v140 = vld [vmem:[#allocation7 + $0x2c] sm:$0xf]
    %v141 = vld [vmem:[#allocation7 + $0x30] sm:$0xf]
    %v142 = vld [vmem:[#allocation7 + $0x34] sm:$0xf]
    %v143 = vld [vmem:[#allocation7 + $0x38] sm:$0xf]
    %v144 = vld [vmem:[#allocation7 + $0x3c] sm:$0xf]
    %v146 = vlaneseq
    %v147 = vshrl.u32 %v146, 7
    %v148 = vsub.s32 0, %v147
    %v149 = vrot.slane %v59, %v148
    %v167 = vunpack.c.l.b16 %v129
    %v168 = vunpack.c.l.b16 %v130
    %v169 = vunpack.c.l.b16 %v131
    %v170 = vunpack.c.l.b16 %v132
    %v171 = vunpack.c.l.b16 %v133
    %v172 = vunpack.c.l.b16 %v134
    %v173 = vunpack.c.l.b16 %v135
    %v174 = vunpack.c.l.b16 %v136
    %v175 = vunpack.c.l.b16 %v137
    %v176 = vunpack.c.l.b16 %v138
    %v177 = vunpack.c.l.b16 %v139
    %v178 = vunpack.c.l.b16 %v140
    %v179 = vunpack.c.l.b16 %v141
    %v180 = vunpack.c.l.b16 %v142
    %v181 = vunpack.c.l.b16 %v143
    %v182 = vunpack.c.l.b16 %v144
    %v183 = vpack.c.b16 %v168, %v167
    %v184 = vpack.c.b16 %v170, %v169
    %v185 = vpack.c.b16 %v172, %v171
    %v186 = vpack.c.b16 %v174, %v173
    %v187 = vpack.c.b16 %v176, %v175
    %v188 = vpack.c.b16 %v178, %v177
    %v189 = vpack.c.b16 %v180, %v179
    %v190 = vpack.c.b16 %v182, %v181
    %199 = vmatprep.subr.bf16.mxu0 0
    %200 = vmatpush1.bf16.msra.mxu0 %v183
    %201 = vmatprep.subr.bf16.mxu0 0
    %202 = vmatpush1.bf16.msra.mxu0 %v184
    %203 = vmatprep.subr.bf16.mxu0 0
    %204 = vmatpush1.bf16.msra.mxu0 %v185
    %205 = vmatprep.subr.bf16.mxu0 0
    %206 = vmatpush1.bf16.msra.mxu0 %v186
    %207 = vmatprep.subr.bf16.mxu0 0
    %208 = vmatpush1.bf16.msra.mxu0 %v187
    %209 = vmatprep.subr.bf16.mxu0 0
    %210 = vmatpush1.bf16.msra.mxu0 %v188
    %211 = vmatprep.subr.bf16.mxu0 0
    %212 = vmatpush1.bf16.msra.mxu0 %v189
    %213 = vmatprep.subr.bf16.mxu0 0
    %214 = vmatpush1.bf16.msra.mxu0 %v190
    %215 = vmatprep.subr.bf16.mxu0 0
    %216 = vmatpush1.bf16.msra.mxu0 0
    %217 = vmatprep.subr.bf16.mxu0 0
    %218 = vmatpush1.bf16.msra.mxu0 0
    %219 = vmatprep.subr.bf16.mxu0 0
    %220 = vmatpush1.bf16.msra.mxu0 0
    %221 = vmatprep.subr.bf16.mxu0 0
    %222 = vmatpush1.bf16.msra.mxu0 0
    %223 = vmatprep.subr.bf16.mxu0 0
    %224 = vmatpush1.bf16.msra.mxu0 0
    %225 = vmatprep.subr.bf16.mxu0 0
    %226 = vmatpush1.bf16.msra.mxu0 0
    %227 = vmatprep.subr.bf16.mxu0 0
    %228 = vmatpush1.bf16.msra.mxu0 0
    %229 = vmatprep.subr.bf16.mxu0 0
    %230 = vmatpush1.bf16.msra.mxu0 0
    %231 = vmatprep.mubr.bf16.mxu0 0
    %232 = vmatmul.mubr.bf16.gmra.mrb[0].mxu0 %v128
    %v233 = vpop.f32.mrb[0].mxu0
    %v234 = vadd.f32 %v149, %v233
    %v235 = vpop.f32.mrb[0].mxu0
    %v236 = vpop.f32.mrb[0].mxu0
    %v237 = vpop.f32.mrb[0].mxu0
    %238 = vdwg.mxu0
    %v239 = vlaneseq
    %v240 = vand.u32 %v239, 127
    %vm241 = vcmp.ge.s32.totalorder %v240, 16
    %v242 = vtanh.pop %v234
    %v243 = vmul.f32 %v242, 3.1415927
    %v244 = vsel %vm241, %v243, %v234
    %245 = vst [vmem:[#allocation8] sm:$0xff] %v244
    // Predicated region
    $region30: #{tpu_custom_call.1} parent=1 // pred_check
      _
    $region31: #{tpu_custom_call.1} parent=1 // pred_check_branch
      %247 = sbr.rel (0) target = $region33
    $region32: #{tpu_custom_call.1} parent=1 // pred_region
      %s249 = ssub.s32 128, 128
      %250 = vsyncadd [#allocation4], %s249
      %s252 = sshll.u32 [#allocation8], 4
      %s253 = int_to_ptr.vmem [resolvable:$true] %s252
      %255 = dma.vmem_to_hbm [thread:$0]  %s253, 128, %s4, [#allocation4]
    $region33: #{tpu_custom_call.1} parent=1 // pred_fallthru
      _
    // Predicated region
    $region34: #{tpu_custom_call.1} parent=1 // pred_check
      _
    $region35: #{tpu_custom_call.1} parent=1 // pred_check_branch
      %257 = sbr.rel (0) target = $region37
    $region36: #{tpu_custom_call.1} parent=1 // pred_region
      %258 = dma.done [#allocation4], 128
    $region37: #{tpu_custom_call.1} parent=1 // pred_fallthru
      _
    %259 = vsyncpa [#allocation3], 1
    %260 = vsyncpa [#allocation6], 1
    %261 = vsyncpa [#allocation4], 1

</llo_original>
